<compile_context>
chip_gen: v5e
topology: v5e:2x2
jax: 0.10.0
libtpu: 0.0.40
codegen_flags: <defaults>
</compile_context>

<pallas_src>
import jax
import jax.numpy as jnp
from jax import lax
from jax.experimental import pallas as pl
from jax.experimental.pallas import tpu as pltpu

BN_EPS = 1e-5


# ----------------------------- helpers ----------------------------------------
def _cdiv(a, b):
    return -(-a // b)


def _round_up(a, b):
    return _cdiv(a, b) * b


def _vmem_budget_bytes():
    """Generation-aware VMEM budget: ~75% of physical capacity.

    Falls back to 64 MiB (v7x per-TC physical VMEM) if the query fails, so the
    default is safe on every generation."""
    cap = 64 * 1024 * 1024
    try:
        cap = int(getattr(pltpu.get_tpu_info(), "vmem_capacity_bytes", cap))
    except Exception:
        pass
    return (cap * 3) // 4


def _resident_spec(block_shape, index_map):
    """BlockSpec for a grid-invariant operand: single-buffer it so it is not
    double-buffered (halves its VMEM footprint; matters most on v7x's 64 MiB
    VMEM).  Falls back to a plain BlockSpec if this jax version's BlockSpec
    does not accept pipeline_mode."""
    try:
        return pl.BlockSpec(block_shape, index_map, pipeline_mode=pl.Buffered(1))
    except Exception:
        return pl.BlockSpec(block_shape, index_map)


def _pick_tm(n, din, hdim, odim, dsize, budget):
    """Largest batch tile that fits the VMEM budget (double-buffered streamed
    tiles + resident weights); prefer >= 2 tiles so both v7x TensorCores get
    work and the DMA pipeline has something to overlap."""
    resident = (din * hdim + hdim * odim) * dsize + 8 * hdim * 4 + 4 * odim * 4
    tm = 8
    for cand in (2048, 1024, 512, 256, 128, 64, 32, 16, 8):
        streamed = 2 * cand * (din + hdim + odim) * max(dsize, 4)
        if resident + streamed <= budget:
            tm = cand
            break
    tm = min(tm, max(8, _round_up(n, 8)))     # don't pad a tiny batch to a huge tile
    while tm > 8 and _cdiv(n, tm) < 2:
        tm = max(8, _round_up(tm // 2, 8))
    return tm


# ------------------------------- pass 1 ----------------------------------------
def linear1_stats_kernel(x_ref, w1_ref, sum_ref, sumsq_ref):
    """Per-tile: h = x @ w1 (f32 accumulate) -> per-column sum / sum-of-squares.

    Linear-1's bias is intentionally NOT added: BatchNorm1d in training mode
    subtracts the batch mean, which cancels a per-column bias exactly.
    Per-tile partial stats (instead of a resident accumulator) keep the batch
    grid axis "parallel" -> megacore-shardable on v7x."""
    h = jnp.dot(x_ref[...], w1_ref[...], preferred_element_type=jnp.float32)
    sum_ref[...] = jnp.sum(h, axis=0, keepdims=True).reshape(sum_ref.shape)
    sumsq_ref[...] = jnp.sum(h * h, axis=0, keepdims=True).reshape(sumsq_ref.shape)


def linear1_stats_h_kernel(x_ref, w1_ref, h_ref, sum_ref, sumsq_ref):
    """Same as linear1_stats_kernel, but also streams h back to HBM.
    Used when dim_in > hidden_dim (storing h is then cheaper than recompute)."""
    h = jnp.dot(x_ref[...], w1_ref[...], preferred_element_type=jnp.float32)
    h_ref[...] = h.astype(h_ref.dtype)
    sum_ref[...] = jnp.sum(h, axis=0, keepdims=True).reshape(sum_ref.shape)
    sumsq_ref[...] = jnp.sum(h * h, axis=0, keepdims=True).reshape(sumsq_ref.shape)


# ------------------------------- pass 2 ----------------------------------------
def bn_relu_linear2_kernel(h_ref, scale_ref, shift_ref, w2_ref, b2_ref, o_ref):
    """Pre-folded BN scale/shift + ReLU + Linear-2 on a stored h tile."""
    h = h_ref[...].astype(jnp.float32)
    h = jnp.maximum(h * scale_ref[...] + shift_ref[...], 0.0)
    out = jnp.dot(h.astype(w2_ref.dtype), w2_ref[...],
                  preferred_element_type=jnp.float32)
    o_ref[...] = (out + b2_ref[...]).astype(o_ref.dtype)


def recompute_bn_relu_linear2_kernel(x_ref, w1_ref, scale_ref, shift_ref,
                                     w2_ref, b2_ref, o_ref):
    """Recompute h = x @ w1 (no h HBM roundtrip) + folded BN + ReLU + Linear-2."""
    h = jnp.dot(x_ref[...], w1_ref[...], preferred_element_type=jnp.float32)
    h = jnp.maximum(h * scale_ref[...] + shift_ref[...], 0.0)
    out = jnp.dot(h.astype(w2_ref.dtype), w2_ref[...],
                  preferred_element_type=jnp.float32)
    o_ref[...] = (out + b2_ref[...]).astype(o_ref.dtype)


# ------------------------------- wrapper ----------------------------------------
def prediction_mlp(x, w1, b1, gamma, beta, w2, b2, *, tm=None,
                   use_bf16_matmul=False, recompute_h=None):
    """PredictionMLP forward: Linear -> BatchNorm1d (PyTorch training mode:
    batch statistics, biased variance) -> ReLU -> Linear.  x: [N, din] -> [N, out]."""
    # Linear-1 bias is mathematically dead under training-mode BatchNorm (the
    # batch-mean subtraction cancels it exactly); kept in the API for parity.
    # TODO(synk): if eval-mode BN / running-stat updates are ever needed, b1
    # must be re-introduced (it shifts running_mean).
    del b1

    out_dtype = x.dtype
    n, din = x.shape
    hdim = w1.shape[1]
    odim = w2.shape[1]

    if use_bf16_matmul:
        # Cast in the wrapper: halves x/w1/w2 HBM traffic and feeds the MXU
        # native bf16 (v6e/v7x fast path).  Accumulation / BN math stay f32.
        x = x.astype(jnp.bfloat16)
        w1 = w1.astype(jnp.bfloat16)
        w2 = w2.astype(jnp.bfloat16)
    dsize = x.dtype.itemsize

    if recompute_h is None:
        # Recomputing x @ w1 in pass 2 beats writing + re-reading h whenever
        # reading x again costs less HBM traffic than the h roundtrip.
        recompute_h = din <= hdim

    budget = _vmem_budget_bytes()
    if tm is None:
        tm = _pick_tm(n, din, hdim, odim, dsize, budget)
    tm = int(tm)

    # Graceful fallback for batch sizes not divisible by the tile: zero-pad.
    # Zero rows contribute nothing to the column sums / sums-of-squares (the
    # bias is dropped), so stats computed with inv_n = 1/n stay exact.
    n_pad = _round_up(n, tm)
    if n_pad != n:
        x = jnp.pad(x, ((0, n_pad - n), (0, 0)))
    nb = n_pad // tm

    compiler_params = pltpu.CompilerParams(
        dimension_semantics=("parallel",),   # both passes megacore-shardable
        vmem_limit_bytes=budget)

    # --- pass 1: Linear-1 + per-tile partial column stats ------------------------
    stats_shape = jax.ShapeDtypeStruct((nb, 1, hdim), jnp.float32)
    stats_spec = pl.BlockSpec((1, 1, hdim), lambda i: (i, 0, 0))
    in_specs1 = [
        pl.BlockSpec((tm, din), lambda i: (i, 0)),        # x tile (streamed)
        _resident_spec((din, hdim), lambda i: (0, 0)),    # w1 resident, 1-buffered
    ]
    if recompute_h:
        kernel1 = linear1_stats_kernel
        out_shape1 = (stats_shape, stats_shape)
        out_specs1 = (stats_spec, stats_spec)
        bytes1 = (n_pad * din + din * hdim) * dsize + 2 * nb * hdim * 4
    else:
        kernel1 = linear1_stats_h_kernel
        out_shape1 = (jax.ShapeDtypeStruct((n_pad, hdim), x.dtype),
                      stats_shape, stats_shape)
        out_specs1 = (pl.BlockSpec((tm, hdim), lambda i: (i, 0)),
                      stats_spec, stats_spec)
        bytes1 = (n_pad * din + din * hdim + n_pad * hdim) * dsize + 2 * nb * hdim * 4

    res1 = pl.pallas_call(
        kernel1,
        grid=(nb,),
        in_specs=in_specs1,
        out_specs=out_specs1,
        out_shape=out_shape1,
        compiler_params=compiler_params,
        cost_estimate=pl.CostEstimate(
            flops=2 * n_pad * din * hdim + 3 * n_pad * hdim,
            transcendentals=0,
            bytes_accessed=bytes1),
    )(x, w1)
    if recompute_h:
        psum, psumsq = res1
        h = None
    else:
        h, psum, psumsq = res1

    # --- tiny JAX glue: reduce partial stats, fold BN into scale/shift ----------
    inv_n = 1.0 / n                        # real batch size (padded rows sum to 0)
    col_sum = jnp.sum(psum, axis=(0, 1), dtype=jnp.float32)      # [H]
    col_sumsq = jnp.sum(psumsq, axis=(0, 1), dtype=jnp.float32)  # [H]
    mean = col_sum * inv_n
    # TODO(synk): E[h^2]-E[h]^2 in f32 can cancel when |mean| >> std; switch to
    # a centered / Welford-style accumulation if activations can get that large.
    var = jnp.maximum(col_sumsq * inv_n - mean * mean, 0.0)      # biased (PyTorch train)
    g = jnp.reshape(gamma, (1, hdim)).astype(jnp.float32)
    b = jnp.reshape(beta, (1, hdim)).astype(jnp.float32)
    scale = g * lax.rsqrt(var + BN_EPS)                          # [1, H]
    shift = b - mean * scale                                     # [1, H]
    b2f = jnp.reshape(b2, (1, odim)).astype(jnp.float32)

    # --- pass 2: (recompute Linear-1) + folded BN + ReLU + Linear-2 --------------
    common_specs = [
        _resident_spec((1, hdim), lambda i: (0, 0)),     # scale resident
        _resident_spec((1, hdim), lambda i: (0, 0)),     # shift resident
        _resident_spec((hdim, odim), lambda i: (0, 0)),  # w2 resident
        _resident_spec((1, odim), lambda i: (0, 0)),     # b2 resident
    ]
    if recompute_h:
        kernel2 = recompute_bn_relu_linear2_kernel
        in_specs2 = [pl.BlockSpec((tm, din), lambda i: (i, 0)),
                     _resident_spec((din, hdim), lambda i: (0, 0))] + common_specs
        args2 = (x, w1, scale, shift, w2, b2f)
        flops2 = 2 * n_pad * din * hdim + 2 * n_pad * hdim * odim + 3 * n_pad * hdim
        bytes2 = (n_pad * din + din * hdim + hdim * odim + n_pad * odim) * dsize
    else:
        kernel2 = bn_relu_linear2_kernel
        in_specs2 = [pl.BlockSpec((tm, hdim), lambda i: (i, 0))] + common_specs
        args2 = (h, scale, shift, w2, b2f)
        flops2 = 2 * n_pad * hdim * odim + 3 * n_pad * hdim
        bytes2 = (n_pad * hdim + hdim * odim + n_pad * odim) * dsize

    out = pl.pallas_call(
        kernel2,
        grid=(nb,),
        in_specs=in_specs2,
        out_specs=pl.BlockSpec((tm, odim), lambda i: (i, 0)),
        out_shape=jax.ShapeDtypeStruct((n_pad, odim), out_dtype),
        compiler_params=compiler_params,
        cost_estimate=pl.CostEstimate(
            flops=flops2, transcendentals=0, bytes_accessed=bytes2),
    )(*args2)

    return out[:n] if n_pad != n else out


# ------------------------------ params / reference -----------------------------
def init_params(key, dim_in, hidden_dim, out_dim, dtype=jnp.float32):
    """PyTorch-nn.Linear-style uniform init; weights pre-transposed to [in, out]."""
    k1, k2, k3, k4 = jax.random.split(key, 4)
    bound1 = 1.0 / (dim_in ** 0.5)
    bound2 = 1.0 / (hidden_dim ** 0.5)
    w1 = jax.random.uniform(k1, (dim_in, hidden_dim), dtype, -bound1, bound1)
    b1 = jax.random.uniform(k2, (1, hidden_dim), dtype, -bound1, bound1)
    gamma = jnp.ones((1, hidden_dim), dtype)
    beta = jnp.zeros((1, hidden_dim), dtype)
    w2 = jax.random.uniform(k3, (hidden_dim, out_dim), dtype, -bound2, bound2)
    b2 = jax.random.uniform(k4, (1, out_dim), dtype, -bound2, bound2)
    return w1, b1, gamma, beta, w2, b2


def reference_forward(x, w1, b1, gamma, beta, w2, b2):
    """Pure-JAX reference matching the PyTorch module (b1 included; it cancels)."""
    hp = lax.Precision.HIGHEST
    h = jnp.dot(x, w1, precision=hp) + b1
    mean = jnp.mean(h, axis=0, keepdims=True)
    var = jnp.mean((h - mean) ** 2, axis=0, keepdims=True)
    h = (h - mean) / jnp.sqrt(var + BN_EPS) * gamma + beta
    h = jnp.maximum(h, 0.0)
    return jnp.dot(h, w2, precision=hp) + b2


if __name__ == "__main__":
    # Lane-aligned feature dims (multiples of 128).  dim_in < hidden, so the
    # default path recomputes x @ w1 in pass 2 (no h HBM roundtrip).
    N, DIM_IN, HIDDEN, OUT = 256, 128, 256, 128

    key = jax.random.PRNGKey(0)
    kx, kp = jax.random.split(key)
    x = jax.random.normal(kx, (N, DIM_IN), jnp.float32)
    params = init_params(kp, DIM_IN, HIDDEN, OUT)
    ref = reference_forward(x, *params)

    # 1) f32, default (recompute-h) path.
    out = jax.block_until_ready(prediction_mlp(x, *params))
    assert out.shape == (N, OUT)
    assert jnp.allclose(out, ref, atol=1e-3, rtol=1e-3), "recompute path mismatch"

    # 2) f32, stored-h path + batch not divisible by the tile (zero-pad fallback).
    xs = x[:200]
    refs = reference_forward(xs, *params)
    outs = jax.block_until_ready(prediction_mlp(xs, *params, recompute_h=False))
    assert outs.shape == (200, OUT)
    assert jnp.allclose(outs, refs, atol=1e-3, rtol=1e-3), "stored-h path mismatch"

    # 3) opt-in bf16 MXU mode (v6e/v7x fast path); looser tolerance vs f32 ref.
    outb = jax.block_until_ready(prediction_mlp(x, *params, use_bf16_matmul=True))
    assert outb.shape == (N, OUT)
    assert jnp.allclose(outb, ref, atol=1e-1, rtol=1e-1), "bf16 path mismatch"

    print("KERNEL_OK")
</pallas_src>

<mosaic_0001>
module attributes {stable_mosaic.version = 11 : i64} {
  func.func @linear1_stats_kernel(%arg0: i32, %arg1: memref<128x128xf32, #tpu.memory_space<vmem>>, %arg2: memref<128x256xf32, #tpu.memory_space<vmem>>, %arg3: memref<1x1x256xf32, #tpu.memory_space<vmem>>, %arg4: memref<1x1x256xf32, #tpu.memory_space<vmem>>) attributes {dimension_semantics = [#tpu.dimension_semantics<parallel>], iteration_bounds = array<i64: 2>, scalar_prefetch = 0 : i64, scratch_operands = 0 : i64, tpu.core_type = #tpu.core_type<tc>, window_params = [{transform_indices = @transform_0, window_bounds = array<i64: 128, 128>}, {pipeline_mode = #tpu.pipeline_mode<synchronous>, transform_indices = @transform_1, window_bounds = array<i64: 128, 256>}, {transform_indices = @transform_2, window_bounds = array<i64: 1, 1, 256>}, {transform_indices = @transform_3, window_bounds = array<i64: 1, 1, 256>}]} {
    %c0 = arith.constant 0 : index
    %c0_0 = arith.constant 0 : index
    %0 = vector.load %arg1[%c0, %c0_0] : memref<128x128xf32, #tpu.memory_space<vmem>>, vector<128x128xf32>
    %c0_1 = arith.constant 0 : index
    %c0_2 = arith.constant 0 : index
    %1 = vector.load %arg2[%c0_1, %c0_2] : memref<128x256xf32, #tpu.memory_space<vmem>>, vector<128x256xf32>
    %cst = arith.constant dense<0.000000e+00> : vector<128x256xf32>
    %2 = tpu.matmul %0, %1, %cst {dimension_numbers = #tpu.dot_dimension_numbers<[1], [0], [0], [1], [0, 0, 1, 1], [], []>} : vector<128x128xf32>, vector<128x256xf32>, vector<128x256xf32> -> vector<128x256xf32>
    %cst_3 = arith.constant dense<0.000000e+00> : vector<256xf32>
    %3 = vector.multi_reduction <add>, %2, %cst_3 [0] : vector<128x256xf32> to vector<256xf32>
    %4 = vector.shape_cast %3 : vector<256xf32> to vector<1x256xf32>
    %5 = vector.shape_cast %4 : vector<1x256xf32> to vector<1x1x256xf32>
    %c0_4 = arith.constant 0 : index
    %c0_5 = arith.constant 0 : index
    %c0_6 = arith.constant 0 : index
    %6 = vector.load %arg3[%c0_4, %c0_5, %c0_6] : memref<1x1x256xf32, #tpu.memory_space<vmem>>, vector<1x1x256xf32>
    tpu.vector_store %arg3[%c0_4, %c0_5, %c0_6], %5 {strides = array<i32>} : memref<1x1x256xf32, #tpu.memory_space<vmem>>, vector<1x1x256xf32>,
    %7 = arith.mulf %2, %2 : vector<128x256xf32>
    %cst_7 = arith.constant dense<0.000000e+00> : vector<256xf32>
    %8 = vector.multi_reduction <add>, %7, %cst_7 [0] : vector<128x256xf32> to vector<256xf32>
    %9 = vector.shape_cast %8 : vector<256xf32> to vector<1x256xf32>
    %10 = vector.shape_cast %9 : vector<1x256xf32> to vector<1x1x256xf32>
    %c0_8 = arith.constant 0 : index
    %c0_9 = arith.constant 0 : index
    %c0_10 = arith.constant 0 : index
    %11 = vector.load %arg4[%c0_8, %c0_9, %c0_10] : memref<1x1x256xf32, #tpu.memory_space<vmem>>, vector<1x1x256xf32>
    tpu.vector_store %arg4[%c0_8, %c0_9, %c0_10], %10 {strides = array<i32>} : memref<1x1x256xf32, #tpu.memory_space<vmem>>, vector<1x1x256xf32>,
    return
  }
  func.func @transform_0(%arg0: i32) -> (i32, i32) {
    %c0_i32 = arith.constant 0 : i32
    %c0_i32_0 = arith.constant 0 : i32
    return %arg0, %c0_i32 : i32, i32
  }
  func.func @transform_1(%arg0: i32) -> (i32, i32) {
    %c0_i32 = arith.constant 0 : i32
    %c0_i32_0 = arith.constant 0 : i32
    %c0_i32_1 = arith.constant 0 : i32
    return %c0_i32, %c0_i32_0 : i32, i32
  }
  func.func @transform_2(%arg0: i32) -> (i32, i32, i32) {
    %c0_i32 = arith.constant 0 : i32
    %c0_i32_0 = arith.constant 0 : i32
    %c0_i32_1 = arith.constant 0 : i32
    return %arg0, %c0_i32, %c0_i32_0 : i32, i32, i32
  }
  func.func @transform_3(%arg0: i32) -> (i32, i32, i32) {
    %c0_i32 = arith.constant 0 : i32
    %c0_i32_0 = arith.constant 0 : i32
    %c0_i32_1 = arith.constant 0 : i32
    return %arg0, %c0_i32, %c0_i32_0 : i32, i32, i32
  }
}

</mosaic_0001>

<llo_original>
// kernel: tpu_custom_call.1
$region0: #{tpu_custom_call.1}
  #allocation0 [shape = 'u32[]', space=smem, size = 0x4, offset = 0x4, fixed_abs, tag = 'smem constant byte address 0x4 - core index']
  #allocation1 [shape = 'u32[72,128]{1,0:T(1,128)}', space=vmem, size = 0x9000, scoped, tag = 'internal scratch']
  %s0 = inlined_call_operand.hbm [shape: f32[256,128], index: 0, kind: input, shape index: {}]
  %s1 = inlined_call_operand.hbm [shape: f32[128,256], index: 1, kind: input, shape index: {}]
  %s2 = inlined_call_operand.hbm [shape: f32[2,1,256], index: 2, kind: output, shape index: {0}]
  %s3 = inlined_call_operand.hbm [shape: f32[2,1,256], index: 3, kind: output, shape index: {1}]
  %4 = xla_tuple %s2, %s3
  %s5 = sld [smem:[#allocation0]]
  $region57: #{tpu_custom_call.1} parent=0
    _
  %s7 = ssub.s32 1, %s5
  %s8 = scalar_select 0, %s7, %s5
  $region1: #{tpu_custom_call.1} parent=0
    #allocation2 [shape = 'u8[131072]{0}', space=vmem, size = 0x20000, scoped, tag = 'input window, operand 0']
    #allocation3 [shape = 's32[2]{0}', space=sflag, size = 0x8, scoped, tag = 'scoped memory for tpu_custom_call.1']
    #allocation4 [shape = 's32[2]{0}', space=sflag, size = 0x8, scoped, tag = 'scoped memory for tpu_custom_call.1']
    #allocation5 [shape = 'u8[131072]{0}', space=vmem, size = 0x20000, scoped, tag = 'input window, operand 1, single buffered']
    #allocation6 [shape = 's32[1]{0}', space=sflag, size = 0x4, scoped, tag = 'scoped memory for tpu_custom_call.1']
    #allocation7 [shape = 'u8[2048]{0}', space=vmem, size = 0x800, scoped, tag = 'output window, operand 0']
    #allocation8 [shape = 'u8[2048]{0}', space=vmem, size = 0x800, scoped, tag = 'output window, operand 1']
    #allocation9 [shape = 's32[2]{0}', space=sflag, size = 0x8, scoped, tag = 'scoped memory for tpu_custom_call.1']
    %9 = vsyncpa [#allocation3], 0
    %s10 = scalar_lea.sflag [#allocation3], 1
    %11 = vsyncpa %s10, 0
    %12 = vsyncpa [#allocation6], 0
    %13 = vsyncpa [#allocation4], 0
    %s14 = scalar_lea.sflag [#allocation4], 1
    %15 = vsyncpa %s14, 0
    %16 = vsyncpa [#allocation9], 0
    %s17 = scalar_lea.sflag [#allocation9], 1
    %18 = vsyncpa %s17, 0
    loop: start=0, step=1, limit=4
    $region2: #{tpu_custom_call.1} parent=1 // loop_pre_header
      _
    $region3: #{tpu_custom_call.1} parent=1 // loop_header
      %s20 = sphi 0, %s24
      %p21 = scmp.ge.s32.totalorder %s20, 4
      %s30 = sphi 0, %s32
      %s33 = sphi 0, %s30
      %s34 = sphi 0, %s33
      %s50 = sphi 0, %s34
      %s54 = sphi 0, %s54
      %s56 = sphi 0, %s54
      %s57 = sphi 0, %s56
      %s71 = sphi 0, %s57
      %s77 = sphi 0, %s79
      %s80 = sphi 0, %s77
      %s81 = sphi 0, %s80
      %s97 = sphi 0, %s81
      %s103 = sphi 0, %s105
      %s106 = sphi 0, %s103
      %s107 = sphi 0, %s106
      %s123 = sphi 0, %s107
    $region4: #{tpu_custom_call.1} parent=1 // loop_header_branch
      %23 = sbr.rel (%p21) target = $region8
    $region5: #{tpu_custom_call.1} parent=1 // loop_body
      %s25 = ssub.s32 %s20, 1
      %s26 = ssub.s32 %s20, 2
      %s27 = sadd.s32 %s20, 1
      %s28 = ssub.s32 %s20, %s27
      %p29 = scmp.eq.s32.totalorder %s28, 0
      %s31 = sadd.s32 %s30, 1
      %s32 = scalar_select %p29, %s30, %s31
      %p35 = pneg %p29
      %p36 = scmp.eq.s32.totalorder %s20, 1
      %p37 = por %p35, %p36
      %p38 = scmp.ne.s32.totalorder %s30, %s33
      %p39 = scmp.eq.s32.totalorder %s20, 0
      %p40 = por %p38, %p39
      %p41 = scmp.ne.s32.totalorder %s30, %s33
      %p42 = scmp.eq.s32.totalorder %s25, 1
      %p43 = por %p41, %p42
      %p44 = scmp.ne.s32.totalorder %s33, %s34
      %p45 = scmp.eq.s32.totalorder %s25, 0
      %p46 = por %p44, %p45
      %p47 = scmp.ne.s32.totalorder %s33, %s34
      %p48 = scmp.eq.s32.totalorder %s26, 1
      %p49 = por %p47, %p48
      %p51 = scmp.ne.s32.totalorder %s34, %s50
      %p52 = scmp.eq.s32.totalorder %s26, 0
      %p53 = por %p51, %p52
      %s55 = sadd.s32 %s54, 1
      %p58 = scmp.eq.s32.totalorder %s20, 1
      %p59 = scmp.ne.s32.totalorder %s54, %s56
      %p60 = scmp.eq.s32.totalorder %s20, 0
      %p61 = por %p59, %p60
      %p62 = scmp.ne.s32.totalorder %s54, %s56
      %p63 = scmp.eq.s32.totalorder %s25, 1
      %p64 = por %p62, %p63
      %p65 = scmp.ne.s32.totalorder %s56, %s57
      %p66 = scmp.eq.s32.totalorder %s25, 0
      %p67 = por %p65, %p66
      %p68 = scmp.ne.s32.totalorder %s56, %s57
      %p69 = scmp.eq.s32.totalorder %s26, 1
      %p70 = por %p68, %p69
      %p72 = scmp.ne.s32.totalorder %s57, %s71
      %p73 = scmp.eq.s32.totalorder %s26, 0
      %p74 = por %p72, %p73
      %s75 = ssub.s32 %s20, %s27
      %p76 = scmp.eq.s32.totalorder %s75, 0
      %s78 = sadd.s32 %s77, 1
      %s79 = scalar_select %p76, %s77, %s78
      %p82 = pneg %p76
      %p83 = scmp.eq.s32.totalorder %s20, 1
      %p84 = por %p82, %p83
      %p85 = scmp.ne.s32.totalorder %s77, %s80
      %p86 = scmp.eq.s32.totalorder %s20, 0
      %p87 = por %p85, %p86
      %p88 = scmp.ne.s32.totalorder %s77, %s80
      %p89 = scmp.eq.s32.totalorder %s25, 1
      %p90 = por %p88, %p89
      %p91 = scmp.ne.s32.totalorder %s80, %s81
      %p92 = scmp.eq.s32.totalorder %s25, 0
      %p93 = por %p91, %p92
      %p94 = scmp.ne.s32.totalorder %s80, %s81
      %p95 = scmp.eq.s32.totalorder %s26, 1
      %p96 = por %p94, %p95
      %p98 = scmp.ne.s32.totalorder %s81, %s97
      %p99 = scmp.eq.s32.totalorder %s26, 0
      %p100 = por %p98, %p99
      %s101 = ssub.s32 %s20, %s27
      %p102 = scmp.eq.s32.totalorder %s101, 0
      %s104 = sadd.s32 %s103, 1
      %s105 = scalar_select %p102, %s103, %s104
      %p108 = pneg %p102
      %p109 = scmp.eq.s32.totalorder %s20, 1
      %p110 = por %p108, %p109
      %p111 = scmp.ne.s32.totalorder %s103, %s106
      %p112 = scmp.eq.s32.totalorder %s20, 0
      %p113 = por %p111, %p112
      %p114 = scmp.ne.s32.totalorder %s103, %s106
      %p115 = scmp.eq.s32.totalorder %s25, 1
      %p116 = por %p114, %p115
      %p117 = scmp.ne.s32.totalorder %s106, %s107
      %p118 = scmp.eq.s32.totalorder %s25, 0
      %p119 = por %p117, %p118
      %p120 = scmp.ne.s32.totalorder %s106, %s107
      %p121 = scmp.eq.s32.totalorder %s26, 1
      %p122 = por %p120, %p121
      %p124 = scmp.ne.s32.totalorder %s107, %s123
      %p125 = scmp.eq.s32.totalorder %s26, 0
      %p126 = por %p124, %p125
      %p127 = scmp.le.s32.totalorder 1, %s20
      %p128 = scmp.lt.s32.totalorder %s20, 3
      %p129 = pnand %p127, %p128
      %p130 = pneg %p129
      // Predicated region
      $region9: #{tpu_custom_call.1} parent=5 // pred_check
        _
      $region10: #{tpu_custom_call.1} parent=5 // pred_check_branch
        %132 = sbr.rel (%p129) target = $region12
      $region11: #{tpu_custom_call.1} parent=5 // pred_region
        %s133 = ssub.s32 %s20, 1
        // Predicated region
        $region13: #{tpu_custom_call.1} parent=11 // pred_check
          %p134 = pneg %p67
        $region14: #{tpu_custom_call.1} parent=11 // pred_check_branch
          %136 = sbr.rel (%p134) target = $region16
        $region15: #{tpu_custom_call.1} parent=11 // pred_region
          %138 = vsyncadd [#allocation6], 0
          %s139 = sshll.u32 %s1, 4
          %s140 = int_to_ptr.hbm [resolvable:$true] %s139
          %s141 = sshll.u32 [#allocation5], 4
          %s142 = int_to_ptr.vmem [resolvable:$true] %s141
          %147 = dma.hbm_to_vmem [thread:$0]  %s140, 4096, %s142, [#allocation6], 256, 256, 16
        $region16: #{tpu_custom_call.1} parent=11 // pred_fallthru
          _
      $region12: #{tpu_custom_call.1} parent=5 // pred_fallthru
        _
      %p148 = scmp.lt.s32.totalorder %s20, 2
      // Predicated region
      $region17: #{tpu_custom_call.1} parent=5 // pred_check
        %p149 = pneg %p148
      $region18: #{tpu_custom_call.1} parent=5 // pred_check_branch
        %151 = sbr.rel (%p149) target = $region20
      $region19: #{tpu_custom_call.1} parent=5 // pred_region
        // Predicated region
        $region21: #{tpu_custom_call.1} parent=19 // pred_check
          %p152 = pneg %p40
        $region22: #{tpu_custom_call.1} parent=19 // pred_check_branch
          %154 = sbr.rel (%p152) target = $region24
        $region23: #{tpu_custom_call.1} parent=19 // pred_region
          %s155 = sand.u32 %s30, 1
          %s156 = scalar_lea.sflag [#allocation3], %s155
          %s157 = sand.u32 %s30, 1
          %s158 = smul.addr %s157, 128
          %s159 = scalar_lea.vmem [#allocation2], %s158
          %s160 = smul.u32 16, %s20
          %162 = vsyncadd %s156, 0
          %s163 = smul.addr %s160, 8
          %s164 = scalar_lea.hbm %s0, %s163
          %s165 = sshll.u32 %s164, 4
          %s166 = int_to_ptr.hbm [resolvable:$true] %s165
          %s167 = sshll.u32 %s159, 4
          %s168 = int_to_ptr.vmem [resolvable:$true] %s167
          %173 = dma.hbm_to_vmem [thread:$0]  %s166, 2048, %s168, %s156, 128, 128, 8
        $region24: #{tpu_custom_call.1} parent=19 // pred_fallthru
          _
      $region20: #{tpu_custom_call.1} parent=5 // pred_fallthru
        _
      %p174 = scmp.le.s32.totalorder 1, %s20
      %p175 = scmp.lt.s32.totalorder %s20, 3
      %p176 = pnand %p174, %p175
      %p177 = pneg %p176
      // Predicated region
      $region25: #{tpu_custom_call.1} parent=5 // pred_check
        _
      $region26: #{tpu_custom_call.1} parent=5 // pred_check_branch
        %179 = sbr.rel (%p176) target = $region28
      $region27: #{tpu_custom_call.1} parent=5 // pred_region
        %s180 = ssub.s32 %s20, 1
        %s181 = sand.u32 %s33, 1
        %s182 = scalar_lea.sflag [#allocation3], %s181
        %s183 = sand.u32 %s33, 1
        %s184 = smul.addr %s183, 128
        %s185 = scalar_lea.vmem [#allocation2], %s184
        // Predicated region
        $region29: #{tpu_custom_call.1} parent=27 // pred_check
          %p186 = pneg %p46
        $region30: #{tpu_custom_call.1} parent=27 // pred_check_branch
          %188 = sbr.rel (%p186) target = $region32
        $region31: #{tpu_custom_call.1} parent=27 // pred_region
          %190 = dma.done %s182, 2048
        $region32: #{tpu_custom_call.1} parent=27 // pred_fallthru
          _
        // Predicated region
        $region33: #{tpu_custom_call.1} parent=27 // pred_check
          %p191 = pneg %p67
        $region34: #{tpu_custom_call.1} parent=27 // pred_check_branch
          %193 = sbr.rel (%p191) target = $region36
        $region35: #{tpu_custom_call.1} parent=27 // pred_region
          %195 = dma.done [#allocation6], 4096
        $region36: #{tpu_custom_call.1} parent=27 // pred_fallthru
          _
        %s196 = sand.u32 %s33, 1
        %s197 = scalar_lea.sflag [#allocation3], %s196
        %s198 = sand.u32 %s33, 1
        %s199 = smul.addr %s198, 128
        %s200 = scalar_lea.vmem [#allocation2], %s199
        %p201 = pneg %p46
        %p202 = pneg %p43
        %p203 = pneg %p67
        %p204 = pneg %p64
        %p205 = pneg %p93
        %p206 = pneg %p90
        %s207 = sand.u32 %s80, 1
        %s208 = scalar_lea.sflag [#allocation4], %s207
        %s209 = sand.u32 %s80, 1
        %s210 = smul.addr %s209, 2
        %s211 = scalar_lea.vmem [#allocation7], %s210
        %p212 = pneg %p119
        %p213 = pneg %p116
        %s214 = sand.u32 %s106, 1
        %s215 = scalar_lea.sflag [#allocation9], %s214
        %s216 = sand.u32 %s106, 1
        %s217 = smul.addr %s216, 2
        %s218 = scalar_lea.vmem [#allocation8], %s217
        %s219 = smul.u32 16, %s25
        %v220 = vld [vmem:[%s185] sm:$0xff]
        %v221 = vld [vmem:[%s185 + $0x8] sm:$0xff]
        %v222 = vld [vmem:[%s185 + $0x10] sm:$0xff]
        %v223 = vld [vmem:[%s185 + $0x18] sm:$0xff]
        %v224 = vld [vmem:[%s185 + $0x20] sm:$0xff]
        %v225 = vld [vmem:[%s185 + $0x28] sm:$0xff]
        %v226 = vld [vmem:[%s185 + $0x30] sm:$0xff]
        %v227 = vld [vmem:[%s185 + $0x38] sm:$0xff]
        %v228 = vld [vmem:[%s185 + $0x40] sm:$0xff]
        %v229 = vld [vmem:[%s185 + $0x48] sm:$0xff]
        %v230 = vld [vmem:[%s185 + $0x50] sm:$0xff]
        %v231 = vld [vmem:[%s185 + $0x58] sm:$0xff]
        %v232 = vld [vmem:[%s185 + $0x60] sm:$0xff]
        %v233 = vld [vmem:[%s185 + $0x68] sm:$0xff]
        %v234 = vld [vmem:[%s185 + $0x70] sm:$0xff]
        %v235 = vld [vmem:[%s185 + $0x78] sm:$0xff]
        %v236 = vld [vmem:[#allocation5] sm:$0xff]
        %v237 = vld [vmem:[#allocation5 + $0x8] sm:$0xff]
        %v238 = vld [vmem:[#allocation5 + $0x10] sm:$0xff]
        %v239 = vld [vmem:[#allocation5 + $0x18] sm:$0xff]
        %v240 = vld [vmem:[#allocation5 + $0x20] sm:$0xff]
        %v241 = vld [vmem:[#allocation5 + $0x28] sm:$0xff]
        %v242 = vld [vmem:[#allocation5 + $0x30] sm:$0xff]
        %v243 = vld [vmem:[#allocation5 + $0x38] sm:$0xff]
        %v244 = vld [vmem:[#allocation5 + $0x40] sm:$0xff]
        %v245 = vld [vmem:[#allocation5 + $0x48] sm:$0xff]
        %v246 = vld [vmem:[#allocation5 + $0x50] sm:$0xff]
        %v247 = vld [vmem:[#allocation5 + $0x58] sm:$0xff]
        %v248 = vld [vmem:[#allocation5 + $0x60] sm:$0xff]
        %v249 = vld [vmem:[#allocation5 + $0x68] sm:$0xff]
        %v250 = vld [vmem:[#allocation5 + $0x70] sm:$0xff]
        %v251 = vld [vmem:[#allocation5 + $0x78] sm:$0xff]
        %v252 = vld [vmem:[#allocation5 + $0x80] sm:$0xff]
        %v253 = vld [vmem:[#allocation5 + $0x88] sm:$0xff]
        %v254 = vld [vmem:[#allocation5 + $0x90] sm:$0xff]
        %v255 = vld [vmem:[#allocation5 + $0x98] sm:$0xff]
        %v256 = vld [vmem:[#allocation5 + $0xa0] sm:$0xff]
        %v257 = vld [vmem:[#allocation5 + $0xa8] sm:$0xff]
        %v258 = vld [vmem:[#allocation5 + $0xb0] sm:$0xff]
        %v259 = vld [vmem:[#allocation5 + $0xb8] sm:$0xff]
        %v260 = vld [vmem:[#allocation5 + $0xc0] sm:$0xff]
        %v261 = vld [vmem:[#allocation5 + $0xc8] sm:$0xff]
        %v262 = vld [vmem:[#allocation5 + $0xd0] sm:$0xff]
        %v263 = vld [vmem:[#allocation5 + $0xd8] sm:$0xff]
        %v264 = vld [vmem:[#allocation5 + $0xe0] sm:$0xff]
        %v265 = vld [vmem:[#allocation5 + $0xe8] sm:$0xff]
        %v266 = vld [vmem:[#allocation5 + $0xf0] sm:$0xff]
        %v267 = vld [vmem:[#allocation5 + $0xf8] sm:$0xff]
        %268 = vmatpush.msra.mxu0 %v266
        %269 = vmatpush.msra.mxu0 %v264
        %270 = vmatpush.msra.mxu0 %v262
        %271 = vmatpush.msra.mxu0 %v260
        %272 = vmatpush.msra.mxu0 %v258
        %273 = vmatpush.msra.mxu0 %v256
        %274 = vmatpush.msra.mxu0 %v254
        %275 = vmatpush.msra.mxu0 %v252
        %276 = vmatpush.msra.mxu0 %v250
        %277 = vmatpush.msra.mxu0 %v248
        %278 = vmatpush.msra.mxu0 %v246
        %279 = vmatpush.msra.mxu0 %v244
        %280 = vmatpush.msra.mxu0 %v242
        %281 = vmatpush.msra.mxu0 %v240
        %282 = vmatpush.msra.mxu0 %v238
        %283 = vmatpush.msra.mxu0 %v236
        %284 = vmatmul.f32.gmra.mxu0 %v220
        %v285 = vpop.f32.mrf.mxu0
        %v286 = vadd.f32 0.0, %v285
        %287 = vmatmul.f32.gmra.mxu0 %v221
        %v288 = vpop.f32.mrf.mxu0
        %v289 = vadd.f32 0.0, %v288
        %290 = vmatmul.f32.gmra.mxu0 %v222
        %v291 = vpop.f32.mrf.mxu0
        %v292 = vadd.f32 0.0, %v291
        %293 = vmatmul.f32.gmra.mxu0 %v223
        %v294 = vpop.f32.mrf.mxu0
        %v295 = vadd.f32 0.0, %v294
        %296 = vmatmul.f32.gmra.mxu0 %v224
        %v297 = vpop.f32.mrf.mxu0
        %v298 = vadd.f32 0.0, %v297
        %299 = vmatmul.f32.gmra.mxu0 %v225
        %v300 = vpop.f32.mrf.mxu0
        %v301 = vadd.f32 0.0, %v300
        %302 = vmatmul.f32.gmra.mxu0 %v226
        %v303 = vpop.f32.mrf.mxu0
        %v304 = vadd.f32 0.0, %v303
        %305 = vmatmul.f32.gmra.mxu0 %v227
        %v306 = vpop.f32.mrf.mxu0
        %v307 = vadd.f32 0.0, %v306
        %308 = vmatmul.f32.gmra.mxu0 %v228
        %v309 = vpop.f32.mrf.mxu0
        %v310 = vadd.f32 0.0, %v309
        %311 = vmatmul.f32.gmra.mxu0 %v229
        %v312 = vpop.f32.mrf.mxu0
        %v313 = vadd.f32 0.0, %v312
        %314 = vmatmul.f32.gmra.mxu0 %v230
        %v315 = vpop.f32.mrf.mxu0
        %v316 = vadd.f32 0.0, %v315
        %317 = vmatmul.f32.gmra.mxu0 %v231
        %v318 = vpop.f32.mrf.mxu0
        %v319 = vadd.f32 0.0, %v318
        %320 = vmatmul.f32.gmra.mxu0 %v232
        %v321 = vpop.f32.mrf.mxu0
        %v322 = vadd.f32 0.0, %v321
        %323 = vmatmul.f32.gmra.mxu0 %v233
        %v324 = vpop.f32.mrf.mxu0
        %v325 = vadd.f32 0.0, %v324
        %326 = vmatmul.f32.gmra.mxu0 %v234
        %v327 = vpop.f32.mrf.mxu0
        %v328 = vadd.f32 0.0, %v327
        %329 = vmatmul.f32.gmra.mxu0 %v235
        %v330 = vpop.f32.mrf.mxu0
        %v331 = vadd.f32 0.0, %v330
        %332 = vdwg.mxu0
        %333 = vmatpush.msra.mxu0 %v267
        %334 = vmatpush.msra.mxu0 %v265
        %335 = vmatpush.msra.mxu0 %v263
        %336 = vmatpush.msra.mxu0 %v261
        %337 = vmatpush.msra.mxu0 %v259
        %338 = vmatpush.msra.mxu0 %v257
        %339 = vmatpush.msra.mxu0 %v255
        %340 = vmatpush.msra.mxu0 %v253
        %341 = vmatpush.msra.mxu0 %v251
        %342 = vmatpush.msra.mxu0 %v249
        %343 = vmatpush.msra.mxu0 %v247
        %344 = vmatpush.msra.mxu0 %v245
        %345 = vmatpush.msra.mxu0 %v243
        %346 = vmatpush.msra.mxu0 %v241
        %347 = vmatpush.msra.mxu0 %v239
        %348 = vmatpush.msra.mxu0 %v237
        %349 = vmatmul.f32.gmra.mxu0 %v220
        %v350 = vpop.f32.mrf.mxu0
        %v351 = vadd.f32 0.0, %v350
        %352 = vmatmul.f32.gmra.mxu0 %v221
        %v353 = vpop.f32.mrf.mxu0
        %v354 = vadd.f32 0.0, %v353
        %355 = vmatmul.f32.gmra.mxu0 %v222
        %v356 = vpop.f32.mrf.mxu0
        %v357 = vadd.f32 0.0, %v356
        %358 = vmatmul.f32.gmra.mxu0 %v223
        %v359 = vpop.f32.mrf.mxu0
        %v360 = vadd.f32 0.0, %v359
        %361 = vmatmul.f32.gmra.mxu0 %v224
        %v362 = vpop.f32.mrf.mxu0
        %v363 = vadd.f32 0.0, %v362
        %364 = vmatmul.f32.gmra.mxu0 %v225
        %v365 = vpop.f32.mrf.mxu0
        %v366 = vadd.f32 0.0, %v365
        %367 = vmatmul.f32.gmra.mxu0 %v226
        %v368 = vpop.f32.mrf.mxu0
        %v369 = vadd.f32 0.0, %v368
        %370 = vmatmul.f32.gmra.mxu0 %v227
        %v371 = vpop.f32.mrf.mxu0
        %v372 = vadd.f32 0.0, %v371
        %373 = vmatmul.f32.gmra.mxu0 %v228
        %v374 = vpop.f32.mrf.mxu0
        %v375 = vadd.f32 0.0, %v374
        %376 = vmatmul.f32.gmra.mxu0 %v229
        %v377 = vpop.f32.mrf.mxu0
        %v378 = vadd.f32 0.0, %v377
        %379 = vmatmul.f32.gmra.mxu0 %v230
        %v380 = vpop.f32.mrf.mxu0
        %v381 = vadd.f32 0.0, %v380
        %382 = vmatmul.f32.gmra.mxu0 %v231
        %v383 = vpop.f32.mrf.mxu0
        %v384 = vadd.f32 0.0, %v383
        %385 = vmatmul.f32.gmra.mxu0 %v232
        %v386 = vpop.f32.mrf.mxu0
        %v387 = vadd.f32 0.0, %v386
        %388 = vmatmul.f32.gmra.mxu0 %v233
        %v389 = vpop.f32.mrf.mxu0
        %v390 = vadd.f32 0.0, %v389
        %391 = vmatmul.f32.gmra.mxu0 %v234
        %v392 = vpop.f32.mrf.mxu0
        %v393 = vadd.f32 0.0, %v392
        %394 = vmatmul.f32.gmra.mxu0 %v235
        %v395 = vpop.f32.mrf.mxu0
        %v396 = vadd.f32 0.0, %v395
        %397 = vdwg.mxu0
        %v398 = vadd.f32 %v286, %v289
        %v399 = vadd.f32 %v398, %v292
        %v400 = vadd.f32 %v399, %v295
        %v401 = vadd.f32 %v400, %v298
        %v402 = vadd.f32 %v401, %v301
        %v403 = vadd.f32 %v402, %v304
        %v404 = vadd.f32 %v403, %v307
        %v405 = vadd.f32 %v404, %v310
        %v406 = vadd.f32 %v405, %v313
        %v407 = vadd.f32 %v406, %v316
        %v408 = vadd.f32 %v407, %v319
        %v409 = vadd.f32 %v408, %v322
        %v410 = vadd.f32 %v409, %v325
        %v411 = vadd.f32 %v410, %v328
        %v412 = vadd.f32 %v411, %v331
        %v413 = vrot.slane %v412, 4
        %v414 = vadd.f32 %v412, %v413
        %v415 = vrot.slane %v414, 2
        %v416 = vadd.f32 %v414, %v415
        %v417 = vrot.slane %v416, 1
        %v418 = vadd.f32 %v416, %v417
        %v419 = vadd.f32 %v351, %v354
        %v420 = vadd.f32 %v419, %v357
        %v421 = vadd.f32 %v420, %v360
        %v422 = vadd.f32 %v421, %v363
        %v423 = vadd.f32 %v422, %v366
        %v424 = vadd.f32 %v423, %v369
        %v425 = vadd.f32 %v424, %v372
        %v426 = vadd.f32 %v425, %v375
        %v427 = vadd.f32 %v426, %v378
        %v428 = vadd.f32 %v427, %v381
        %v429 = vadd.f32 %v428, %v384
        %v430 = vadd.f32 %v429, %v387
        %v431 = vadd.f32 %v430, %v390
        %v432 = vadd.f32 %v431, %v393
        %v433 = vadd.f32 %v432, %v396
        %v434 = vrot.slane %v433, 4
        %v435 = vadd.f32 %v433, %v434
        %v436 = vrot.slane %v435, 2
        %v437 = vadd.f32 %v435, %v436
        %v438 = vrot.slane %v437, 1
        %v439 = vadd.f32 %v437, %v438
        %v442 = vrot.slane %v439, 7
        %vm443 = vcmask 1040384
        %v444 = vsel %vm443, %v418, %v442
        %v446 = vlaneseq
        %vm447 = vcmp.ge.s32.totalorder %v446, 0
        %vm448 = vcmp.lt.s32.totalorder %v446, 256
        %vm449 = vmand %vm447, %vm448
        %450 = vst.msk [vmem:[%s211] sm:$0x3] %vm449, %v444
        %v451 = vmul.f32 %v286, %v286
        %v452 = vmul.f32 %v351, %v351
        %v453 = vmul.f32 %v289, %v289
        %v454 = vmul.f32 %v354, %v354
        %v455 = vmul.f32 %v292, %v292
        %v456 = vmul.f32 %v357, %v357
        %v457 = vmul.f32 %v295, %v295
        %v458 = vmul.f32 %v360, %v360
        %v459 = vmul.f32 %v298, %v298
        %v460 = vmul.f32 %v363, %v363
        %v461 = vmul.f32 %v301, %v301
        %v462 = vmul.f32 %v366, %v366
        %v463 = vmul.f32 %v304, %v304
        %v464 = vmul.f32 %v369, %v369
        %v465 = vmul.f32 %v307, %v307
        %v466 = vmul.f32 %v372, %v372
        %v467 = vmul.f32 %v310, %v310
        %v468 = vmul.f32 %v375, %v375
        %v469 = vmul.f32 %v313, %v313
        %v470 = vmul.f32 %v378, %v378
        %v471 = vmul.f32 %v316, %v316
        %v472 = vmul.f32 %v381, %v381
        %v473 = vmul.f32 %v319, %v319
        %v474 = vmul.f32 %v384, %v384
        %v475 = vmul.f32 %v322, %v322
        %v476 = vmul.f32 %v387, %v387
        %v477 = vmul.f32 %v325, %v325
        %v478 = vmul.f32 %v390, %v390
        %v479 = vmul.f32 %v328, %v328
        %v480 = vmul.f32 %v393, %v393
        %v481 = vmul.f32 %v331, %v331
        %v482 = vmul.f32 %v396, %v396
        %v483 = vadd.f32 %v451, %v453
        %v484 = vadd.f32 %v483, %v455
        %v485 = vadd.f32 %v484, %v457
        %v486 = vadd.f32 %v485, %v459
        %v487 = vadd.f32 %v486, %v461
        %v488 = vadd.f32 %v487, %v463
        %v489 = vadd.f32 %v488, %v465
        %v490 = vadd.f32 %v489, %v467
        %v491 = vadd.f32 %v490, %v469
        %v492 = vadd.f32 %v491, %v471
        %v493 = vadd.f32 %v492, %v473
        %v494 = vadd.f32 %v493, %v475
        %v495 = vadd.f32 %v494, %v477
        %v496 = vadd.f32 %v495, %v479
        %v497 = vadd.f32 %v496, %v481
        %v498 = vrot.slane %v497, 4
        %v499 = vadd.f32 %v497, %v498
        %v500 = vrot.slane %v499, 2
        %v501 = vadd.f32 %v499, %v500
        %v502 = vrot.slane %v501, 1
        %v503 = vadd.f32 %v501, %v502
        %v504 = vadd.f32 %v452, %v454
        %v505 = vadd.f32 %v504, %v456
        %v506 = vadd.f32 %v505, %v458
        %v507 = vadd.f32 %v506, %v460
        %v508 = vadd.f32 %v507, %v462
        %v509 = vadd.f32 %v508, %v464
        %v510 = vadd.f32 %v509, %v466
        %v511 = vadd.f32 %v510, %v468
        %v512 = vadd.f32 %v511, %v470
        %v513 = vadd.f32 %v512, %v472
        %v514 = vadd.f32 %v513, %v474
        %v515 = vadd.f32 %v514, %v476
        %v516 = vadd.f32 %v515, %v478
        %v517 = vadd.f32 %v516, %v480
        %v518 = vadd.f32 %v517, %v482
        %v519 = vrot.slane %v518, 4
        %v520 = vadd.f32 %v518, %v519
        %v521 = vrot.slane %v520, 2
        %v522 = vadd.f32 %v520, %v521
        %v523 = vrot.slane %v522, 1
        %v524 = vadd.f32 %v522, %v523
        %v527 = vrot.slane %v524, 7
        %v528 = vsel %vm443, %v503, %v527
        %530 = vst.msk [vmem:[%s218] sm:$0x3] %vm449, %v528
        %s531 = sand.u32 %s80, 1
        %s532 = scalar_lea.sflag [#allocation4], %s531
        %s533 = sand.u32 %s80, 1
        %s534 = smul.addr %s533, 2
        %s535 = scalar_lea.vmem [#allocation7], %s534
        %s536 = sand.u32 %s106, 1
        %s537 = scalar_lea.sflag [#allocation9], %s536
        %s538 = sand.u32 %s106, 1
        %s539 = smul.addr %s538, 2
        %s540 = scalar_lea.vmem [#allocation8], %s539
        // Predicated region
        $region37: #{tpu_custom_call.1} parent=27 // pred_check
          %p541 = pneg %p90
        $region38: #{tpu_custom_call.1} parent=27 // pred_check_branch
          %543 = sbr.rel (%p541) target = $region40
        $region39: #{tpu_custom_call.1} parent=27 // pred_region
          %545 = vsyncadd %s532, 0
          %s546 = smul.addr %s25, 2
          %s547 = scalar_lea.hbm %s2, %s546
          %s549 = sshll.u32 %s535, 4
          %s550 = int_to_ptr.vmem [resolvable:$true] %s549
          %s551 = sshll.u32 %s547, 4
          %s552 = int_to_ptr.hbm [resolvable:$true] %s551
          %554 = dma.vmem_to_hbm [thread:$0]  %s550, 32, %s552, %s532
        $region40: #{tpu_custom_call.1} parent=27 // pred_fallthru
          _
        // Predicated region
        $region41: #{tpu_custom_call.1} parent=27 // pred_check
          %p555 = pneg %p116
        $region42: #{tpu_custom_call.1} parent=27 // pred_check_branch
          %557 = sbr.rel (%p555) target = $region44
        $region43: #{tpu_custom_call.1} parent=27 // pred_region
          %559 = vsyncadd %s537, 0
          %s560 = smul.addr %s25, 2
          %s561 = scalar_lea.hbm %s3, %s560
          %s563 = sshll.u32 %s540, 4
          %s564 = int_to_ptr.vmem [resolvable:$true] %s563
          %s565 = sshll.u32 %s561, 4
          %s566 = int_to_ptr.hbm [resolvable:$true] %s565
          %568 = dma.vmem_to_hbm [thread:$0]  %s564, 32, %s566, %s537
        $region44: #{tpu_custom_call.1} parent=27 // pred_fallthru
          _
      $region28: #{tpu_custom_call.1} parent=5 // pred_fallthru
        _
      %p569 = scmp.le.s32.totalorder 2, %s20
      // Predicated region
      $region45: #{tpu_custom_call.1} parent=5 // pred_check
        %p570 = pneg %p569
      $region46: #{tpu_custom_call.1} parent=5 // pred_check_branch
        %572 = sbr.rel (%p570) target = $region48
      $region47: #{tpu_custom_call.1} parent=5 // pred_region
        %s573 = ssub.s32 %s20, 2
        // Predicated region
        $region49: #{tpu_custom_call.1} parent=47 // pred_check
          %p574 = pneg %p96
        $region50: #{tpu_custom_call.1} parent=47 // pred_check_branch
          %576 = sbr.rel (%p574) target = $region52
        $region51: #{tpu_custom_call.1} parent=47 // pred_region
          %s577 = sand.u32 %s81, 1
          %s578 = scalar_lea.sflag [#allocation4], %s577
          %s579 = sand.u32 %s81, 1
          %s580 = smul.addr %s579, 2
          %s581 = scalar_lea.vmem [#allocation7], %s580
          %583 = dma.done %s578, 32
        $region52: #{tpu_custom_call.1} parent=47 // pred_fallthru
          _
        // Predicated region
        $region53: #{tpu_custom_call.1} parent=47 // pred_check
          %p584 = pneg %p122
        $region54: #{tpu_custom_call.1} parent=47 // pred_check_branch
          %586 = sbr.rel (%p584) target = $region56
        $region55: #{tpu_custom_call.1} parent=47 // pred_region
          %s587 = sand.u32 %s107, 1
          %s588 = scalar_lea.sflag [#allocation9], %s587
          %s589 = sand.u32 %s107, 1
          %s590 = smul.addr %s589, 2
          %s591 = scalar_lea.vmem [#allocation8], %s590
          %593 = dma.done %s588, 32
        $region56: #{tpu_custom_call.1} parent=47 // pred_fallthru
          _
      $region48: #{tpu_custom_call.1} parent=5 // pred_fallthru
        _
    $region6: #{tpu_custom_call.1} parent=1 // loop_footer
      %s24 = sadd.s32 1, %s20
    $region7: #{tpu_custom_call.1} parent=1 // loop_footer_branch
      %19 = sbr.rel target = $region3
    $region8: #{tpu_custom_call.1} parent=1 // loop_exit
      _
    %594 = vsyncpa [#allocation3], 1
    %s595 = scalar_lea.sflag [#allocation3], 1
    %596 = vsyncpa %s595, 1
    %597 = vsyncpa [#allocation6], 1
    %598 = vsyncpa [#allocation4], 1
    %s599 = scalar_lea.sflag [#allocation4], 1
    %600 = vsyncpa %s599, 1
    %601 = vsyncpa [#allocation9], 1
    %s602 = scalar_lea.sflag [#allocation9], 1
    %603 = vsyncpa %s602, 1

</llo_original>
